<compile_context>
chip_gen: v5e
topology: v5e:2x2
jax: 0.10.0
libtpu: 0.0.40
codegen_flags: <defaults>
</compile_context>

<pallas_src>
import jax
import jax.numpy as jnp
from jax.experimental import pallas as pl
from jax.experimental.pallas import tpu as pltpu


_LANES_BIG = 1024
_LANES_SMALL = 128
_BLOCK_BYTES = 8 << 20          # per-buffer tile budget (f32: 2048 x 1024 rows)
_VMEM_LIMIT_BYTES = 48 << 20    # 2 arrays x 2 buffers x 8 MiB = 32 MiB + headroom


def _fma_kernel(wb_ref, x_ref, o_ref):
    # wb_ref: (2,) f32 in SMEM -> (w, b). x_ref/o_ref: (block_rows, lanes) VMEM tiles.
    w = wb_ref[0]
    b = wb_ref[1]
    o_ref[...] = (x_ref[...].astype(jnp.float32) * w + b).astype(o_ref.dtype)


def least_squares_forward(x, weight, bias, *, max_block_rows=None,
                          min_pallas_elems=None):
    """Forward of nn.Linear(1, 1): y = x @ W.T + b == x * w + b, x shape (..., 1)."""
    orig_shape = x.shape
    w = weight.reshape(()).astype(jnp.float32)
    b = bias.reshape(()).astype(jnp.float32)

    flat = x.reshape(-1)                         # contiguous -> free reshape
    n = flat.shape[0]

    itemsize = jnp.dtype(x.dtype).itemsize
    min_rows = max(8, 32 // itemsize)            # sublane tile: 8 f32 / 16 bf16 / 32 i8
    lanes = _LANES_BIG if n >= 8 * _LANES_BIG else _LANES_SMALL

    if max_block_rows is None:                   # dtype-aware byte budget
        max_block_rows = max(
            min_rows, (_BLOCK_BYTES // (lanes * itemsize)) // min_rows * min_rows)
    if min_pallas_elems is None:
        min_pallas_elems = max_block_rows * lanes

    rows = pl.cdiv(n, lanes)
    # Tiny / thin inputs: a single small grid step is dominated by custom-call
    # launch + DMA setup; a fused XLA FMA is strictly faster.
    if n < min_pallas_elems or rows < min_rows:
        return (flat.astype(jnp.float32) * w + b).astype(x.dtype).reshape(orig_shape)

    # Only pad up to a lane multiple (< lanes extra elems) for the flat->2D
    # reshape; the row dimension is handled by a partial last grid block.
    ragged = (n % lanes) != 0
    if ragged:
        flat = jnp.pad(flat, (0, rows * lanes - n))
    x2d = flat.reshape(rows, lanes)              # lane-dense slab

    # Biggest tile within budget, never taller than the array (rounded down to
    # the sublane tile), split so the grid has >= 2 steps when possible so the
    # "parallel" axis can feed both v7x TensorCores.
    block_rows = min(max_block_rows, max(min_rows, (rows // min_rows) * min_rows))
    while pl.cdiv(rows, block_rows) < 2 and block_rows >= 2 * min_rows:
        block_rows = max(min_rows, (block_rows // 2) // min_rows * min_rows)

    wb = jnp.stack([w, b])                       # (2,) f32 scalars -> SMEM

    grid = (pl.cdiv(rows, block_rows),)          # partial last block is masked
    out2d = pl.pallas_call(
        _fma_kernel,
        out_shape=jax.ShapeDtypeStruct((rows, lanes), x.dtype),
        grid=grid,
        in_specs=[
            pl.BlockSpec(memory_space=pltpu.MemorySpace.SMEM),    # (w, b) scalars
            pl.BlockSpec((block_rows, lanes), lambda i: (i, 0)),  # x tile
        ],
        out_specs=pl.BlockSpec((block_rows, lanes), lambda i: (i, 0)),
        compiler_params=pltpu.CompilerParams(
            dimension_semantics=("parallel",),      # v7x: shard grid across TCs
            vmem_limit_bytes=_VMEM_LIMIT_BYTES,     # allow 8 MiB double-buffered tiles
        ),
    )(wb, x2d)

    out_flat = out2d.reshape(-1)
    if ragged:
        out_flat = out_flat[:n]                  # only pay the slice on ragged sizes
    return out_flat.reshape(orig_shape)


if __name__ == "__main__":
    key = jax.random.PRNGKey(0)
    kx, kw, kb = jax.random.split(key, 3)

    # nn.Linear(1, 1) parameters: weight (1, 1), bias (1,)
    weight = jax.random.uniform(kw, (1, 1), jnp.float32, minval=-1.0, maxval=1.0)
    bias = jax.random.uniform(kb, (1,), jnp.float32, minval=-1.0, maxval=1.0)

    def ref_fn(xv):
        return xv.astype(jnp.float32) @ weight.T + bias

    # 1) Lane-aligned input with a partial last grid block (20 rows, 16-row
    #    blocks -> 2 steps, second masked). No pad, no slice.
    n1 = 20 * 1024
    x1 = jax.random.normal(kx, (n1, 1), jnp.float32)
    out1 = jax.block_until_ready(
        least_squares_forward(x1, weight, bias, max_block_rows=16, min_pallas_elems=0))
    assert out1.shape == (n1, 1)
    assert jnp.allclose(out1, ref_fn(x1), atol=1e-6), "aligned / partial-block mismatch"

    # 2) Ragged tail (n % 1024 != 0): small lane pad + final slice, 5 grid steps.
    n2 = 40000
    x2 = jax.random.normal(kx, (n2, 1), jnp.float32)
    out2 = jax.block_until_ready(
        least_squares_forward(x2, weight, bias, max_block_rows=8, min_pallas_elems=0))
    assert out2.shape == (n2, 1)
    assert jnp.allclose(out2, ref_fn(x2), atol=1e-6), "ragged-tail mismatch"

    # 3) bf16 path: dtype-aware 16-row sublane tile.
    x4 = jax.random.normal(kx, (n1, 1), jnp.bfloat16)
    out4 = jax.block_until_ready(
        least_squares_forward(x4, weight, bias, max_block_rows=16, min_pallas_elems=0))
    assert out4.dtype == jnp.bfloat16
    assert jnp.allclose(out4.astype(jnp.float32), ref_fn(x4), atol=5e-2, rtol=5e-2), \
        "bf16 path mismatch"

    # 4) Tiny batch: plain XLA fallback (Pallas launch overhead not worth it).
    x3 = jax.random.normal(kx, (8, 1), jnp.float32)
    out3 = jax.block_until_ready(least_squares_forward(x3, weight, bias))
    assert jnp.allclose(out3, ref_fn(x3), atol=1e-6), "tiny path mismatch"

    print("KERNEL_OK")
</pallas_src>

<mosaic_0001>
module attributes {stable_mosaic.version = 11 : i64} {
  func.func @_fma_kernel(%arg0: i32, %arg1: memref<2xf32, #tpu.memory_space<smem>>, %arg2: memref<16x1024xf32, #tpu.memory_space<vmem>>, %arg3: memref<16x1024xf32, #tpu.memory_space<vmem>>) attributes {dimension_semantics = [#tpu.dimension_semantics<parallel>], iteration_bounds = array<i64: 2>, scalar_prefetch = 0 : i64, scratch_operands = 0 : i64, tpu.core_type = #tpu.core_type<tc>, window_params = [{transform_indices = @transform_0, window_bounds = array<i64: 2>}, {transform_indices = @transform_1, window_bounds = array<i64: 16, 1024>}, {transform_indices = @transform_2, window_bounds = array<i64: 16, 1024>}]} {
    %c0 = arith.constant 0 : index
    %0 = memref.load %arg1[%c0] : memref<2xf32, #tpu.memory_space<smem>>
    %c1 = arith.constant 1 : index
    %1 = memref.load %arg1[%c1] : memref<2xf32, #tpu.memory_space<smem>>
    %c0_0 = arith.constant 0 : index
    %c0_1 = arith.constant 0 : index
    %2 = vector.load %arg2[%c0_0, %c0_1] : memref<16x1024xf32, #tpu.memory_space<vmem>>, vector<16x1024xf32>
    %3 = vector.broadcast %0 : f32 to vector<16x1024xf32>
    %4 = arith.mulf %2, %3 : vector<16x1024xf32>
    %5 = vector.broadcast %1 : f32 to vector<16x1024xf32>
    %6 = arith.addf %4, %5 : vector<16x1024xf32>
    %c0_2 = arith.constant 0 : index
    %c0_3 = arith.constant 0 : index
    %7 = vector.load %arg3[%c0_2, %c0_3] : memref<16x1024xf32, #tpu.memory_space<vmem>>, vector<16x1024xf32>
    tpu.vector_store %arg3[%c0_2, %c0_3], %6 {strides = array<i32>} : memref<16x1024xf32, #tpu.memory_space<vmem>>, vector<16x1024xf32>,
    return
  }
  func.func @transform_0(%arg0: i32) -> i32 {
    %c0_i32 = arith.constant 0 : i32
    %c0_i32_0 = arith.constant 0 : i32
    return %c0_i32 : i32
  }
  func.func @transform_1(%arg0: i32) -> (i32, i32) {
    %c0_i32 = arith.constant 0 : i32
    %c0_i32_0 = arith.constant 0 : i32
    return %arg0, %c0_i32 : i32, i32
  }
  func.func @transform_2(%arg0: i32) -> (i32, i32) {
    %c0_i32 = arith.constant 0 : i32
    %c0_i32_0 = arith.constant 0 : i32
    return %arg0, %c0_i32 : i32, i32
  }
}

</mosaic_0001>

<llo_original>
// kernel: tpu_custom_call.1
$region0: #{tpu_custom_call.1}
  #allocation0 [shape = 'u32[]', space=smem, size = 0x4, offset = 0x4, fixed_abs, tag = 'smem constant byte address 0x4 - core index']
  #allocation1 [shape = 'u32[72,128]{1,0:T(1,128)}', space=vmem, size = 0x9000, scoped, tag = 'internal scratch']
  %s0 = inlined_call_operand.hbm [shape: f32[2], index: 0, kind: input, shape index: {}]
  %s1 = inlined_call_operand.hbm [shape: f32[20,1024], index: 1, kind: input, shape index: {}]
  %s2 = inlined_call_operand.hbm [shape: f32[20,1024], index: 2, kind: output, shape index: {}]
  %s3 = sld [smem:[#allocation0]]
  $region49: #{tpu_custom_call.1} parent=0
    _
  %s5 = ssub.s32 1, %s3
  %s6 = scalar_select 0, %s5, %s3
  $region1: #{tpu_custom_call.1} parent=0
    #allocation2 [shape = 'u8[512]{0}', space=smem, size = 0x200, scoped, tag = 'input window, operand 0, single buffered']
    #allocation3 [shape = 's32[2]{0}', space=sflag, size = 0x8, scoped, tag = 'scoped memory for tpu_custom_call.1']
    #allocation4 [shape = 's32[2]{0}', space=sflag, size = 0x8, scoped, tag = 'scoped memory for tpu_custom_call.1']
    #allocation5 [shape = 's32[2]{0}', space=sflag, size = 0x8, scoped, tag = 'scoped memory for tpu_custom_call.1']
    #allocation6 [shape = 'u8[131072]{0}', space=vmem, size = 0x20000, scoped, tag = 'input window, operand 1']
    #allocation7 [shape = 'u8[131072]{0}', space=vmem, size = 0x20000, scoped, tag = 'output window, operand 0']
    %7 = vsyncpa [#allocation5], 0
    %8 = vsyncpa [#allocation3], 0
    %s9 = scalar_lea.sflag [#allocation3], 1
    %10 = vsyncpa %s9, 0
    %11 = vsyncpa [#allocation4], 0
    %s12 = scalar_lea.sflag [#allocation4], 1
    %13 = vsyncpa %s12, 0
    loop: start=0, step=1, limit=4
    $region2: #{tpu_custom_call.1} parent=1 // loop_pre_header
      _
    $region3: #{tpu_custom_call.1} parent=1 // loop_header
      %s15 = sphi 0, %s19
      %p16 = scmp.ge.s32.totalorder %s15, 4
      %s23 = sphi 0, %s23
      %s25 = sphi 0, %s23
      %s26 = sphi 0, %s25
      %s40 = sphi 0, %s26
      %s46 = sphi 0, %s48
      %s49 = sphi 0, %s46
      %s50 = sphi 0, %s49
      %s66 = sphi 0, %s50
      %s72 = sphi 0, %s74
      %s75 = sphi 0, %s72
      %s76 = sphi 0, %s75
      %s92 = sphi 0, %s76
    $region4: #{tpu_custom_call.1} parent=1 // loop_header_branch
      %18 = sbr.rel (%p16) target = $region8
    $region5: #{tpu_custom_call.1} parent=1 // loop_body
      %s20 = ssub.s32 %s15, 1
      %s21 = ssub.s32 %s15, 2
      %s22 = sadd.s32 %s15, 1
      %s24 = sadd.s32 %s23, 1
      %p27 = scmp.eq.s32.totalorder %s15, 1
      %p28 = scmp.ne.s32.totalorder %s23, %s25
      %p29 = scmp.eq.s32.totalorder %s15, 0
      %p30 = por %p28, %p29
      %p31 = scmp.ne.s32.totalorder %s23, %s25
      %p32 = scmp.eq.s32.totalorder %s20, 1
      %p33 = por %p31, %p32
      %p34 = scmp.ne.s32.totalorder %s25, %s26
      %p35 = scmp.eq.s32.totalorder %s20, 0
      %p36 = por %p34, %p35
      %p37 = scmp.ne.s32.totalorder %s25, %s26
      %p38 = scmp.eq.s32.totalorder %s21, 1
      %p39 = por %p37, %p38
      %p41 = scmp.ne.s32.totalorder %s26, %s40
      %p42 = scmp.eq.s32.totalorder %s21, 0
      %p43 = por %p41, %p42
      %s44 = ssub.s32 %s15, %s22
      %p45 = scmp.eq.s32.totalorder %s44, 0
      %s47 = sadd.s32 %s46, 1
      %s48 = scalar_select %p45, %s46, %s47
      %p51 = pneg %p45
      %p52 = scmp.eq.s32.totalorder %s15, 1
      %p53 = por %p51, %p52
      %p54 = scmp.ne.s32.totalorder %s46, %s49
      %p55 = scmp.eq.s32.totalorder %s15, 0
      %p56 = por %p54, %p55
      %p57 = scmp.ne.s32.totalorder %s46, %s49
      %p58 = scmp.eq.s32.totalorder %s20, 1
      %p59 = por %p57, %p58
      %p60 = scmp.ne.s32.totalorder %s49, %s50
      %p61 = scmp.eq.s32.totalorder %s20, 0
      %p62 = por %p60, %p61
      %p63 = scmp.ne.s32.totalorder %s49, %s50
      %p64 = scmp.eq.s32.totalorder %s21, 1
      %p65 = por %p63, %p64
      %p67 = scmp.ne.s32.totalorder %s50, %s66
      %p68 = scmp.eq.s32.totalorder %s21, 0
      %p69 = por %p67, %p68
      %s70 = ssub.s32 %s15, %s22
      %p71 = scmp.eq.s32.totalorder %s70, 0
      %s73 = sadd.s32 %s72, 1
      %s74 = scalar_select %p71, %s72, %s73
      %p77 = pneg %p71
      %p78 = scmp.eq.s32.totalorder %s15, 1
      %p79 = por %p77, %p78
      %p80 = scmp.ne.s32.totalorder %s72, %s75
      %p81 = scmp.eq.s32.totalorder %s15, 0
      %p82 = por %p80, %p81
      %p83 = scmp.ne.s32.totalorder %s72, %s75
      %p84 = scmp.eq.s32.totalorder %s20, 1
      %p85 = por %p83, %p84
      %p86 = scmp.ne.s32.totalorder %s75, %s76
      %p87 = scmp.eq.s32.totalorder %s20, 0
      %p88 = por %p86, %p87
      %p89 = scmp.ne.s32.totalorder %s75, %s76
      %p90 = scmp.eq.s32.totalorder %s21, 1
      %p91 = por %p89, %p90
      %p93 = scmp.ne.s32.totalorder %s76, %s92
      %p94 = scmp.eq.s32.totalorder %s21, 0
      %p95 = por %p93, %p94
      %p96 = scmp.le.s32.totalorder 1, %s15
      %p97 = scmp.lt.s32.totalorder %s15, 3
      %p98 = pnand %p96, %p97
      %p99 = pneg %p98
      // Predicated region
      $region9: #{tpu_custom_call.1} parent=5 // pred_check
        _
      $region10: #{tpu_custom_call.1} parent=5 // pred_check_branch
        %101 = sbr.rel (%p98) target = $region12
      $region11: #{tpu_custom_call.1} parent=5 // pred_region
        %s102 = ssub.s32 %s15, 1
        // Predicated region
        $region13: #{tpu_custom_call.1} parent=11 // pred_check
          %p103 = pneg %p36
        $region14: #{tpu_custom_call.1} parent=11 // pred_check_branch
          %105 = sbr.rel (%p103) target = $region16
        $region15: #{tpu_custom_call.1} parent=11 // pred_region
          %107 = vsyncadd [#allocation5], 0
          %s109 = sshll.u32 %s0, 4
          %s110 = int_to_ptr.hbm [resolvable:$true] %s109
          %112 = dma.hbm_to_smem %s110, 16, [#allocation2], [#allocation5]
        $region16: #{tpu_custom_call.1} parent=11 // pred_fallthru
          _
      $region12: #{tpu_custom_call.1} parent=5 // pred_fallthru
        _
      %p113 = scmp.lt.s32.totalorder %s15, 2
      // Predicated region
      $region17: #{tpu_custom_call.1} parent=5 // pred_check
        %p114 = pneg %p113
      $region18: #{tpu_custom_call.1} parent=5 // pred_check_branch
        %116 = sbr.rel (%p114) target = $region20
      $region19: #{tpu_custom_call.1} parent=5 // pred_region
        // Predicated region
        $region21: #{tpu_custom_call.1} parent=19 // pred_check
          %p117 = pneg %p56
        $region22: #{tpu_custom_call.1} parent=19 // pred_check_branch
          %119 = sbr.rel (%p117) target = $region24
        $region23: #{tpu_custom_call.1} parent=19 // pred_region
          %s120 = sand.u32 %s46, 1
          %s121 = scalar_lea.sflag [#allocation3], %s120
          %s122 = sand.u32 %s46, 1
          %s123 = smul.addr %s122, 128
          %s124 = scalar_lea.vmem [#allocation6], %s123
          %s125 = smul.u32 2, %s15
          %s126 = ssub.s32 3, %s125
          %p127 = scmp.lt.s32.totalorder %s126, 2
          %s128 = scalar_select %p127, %s126, 2
          %s129 = smul.u32 8, %s128
          %s130 = smul.u32 %s129, 8
          %s131 = ssub.s32 128, %s130
          %s132 = sshll.u32 %s131, 4
          %133 = vsyncadd %s121, %s132
          %p134 = scmp.ne.s32.totalorder 0, %s130
          %s135 = smul.addr %s125, 8
          %s136 = smul.addr %s135, 8
          %s137 = scalar_lea.hbm %s1, %s136
          %s138 = smul.u32 64, %s128
          %s139 = sshll.u32 %s137, 4
          %s140 = int_to_ptr.hbm [resolvable:$true] %s139
          %s141 = sshll.u32 %s124, 4
          %s142 = int_to_ptr.vmem [resolvable:$true] %s141
          %s143 = sshll.u32 %s138, 4
          %147 = dma.hbm_to_vmem [thread:$0]  (%p134), %s140, %s143, %s142, %s121, 1024, 1024, 64
        $region24: #{tpu_custom_call.1} parent=19 // pred_fallthru
          _
      $region20: #{tpu_custom_call.1} parent=5 // pred_fallthru
        _
      %p148 = scmp.le.s32.totalorder 1, %s15
      %p149 = scmp.lt.s32.totalorder %s15, 3
      %p150 = pnand %p148, %p149
      %p151 = pneg %p150
      // Predicated region
      $region25: #{tpu_custom_call.1} parent=5 // pred_check
        _
      $region26: #{tpu_custom_call.1} parent=5 // pred_check_branch
        %153 = sbr.rel (%p150) target = $region28
      $region27: #{tpu_custom_call.1} parent=5 // pred_region
        %s154 = ssub.s32 %s15, 1
        // Predicated region
        $region29: #{tpu_custom_call.1} parent=27 // pred_check
          %p155 = pneg %p36
        $region30: #{tpu_custom_call.1} parent=27 // pred_check_branch
          %157 = sbr.rel (%p155) target = $region32
        $region31: #{tpu_custom_call.1} parent=27 // pred_region
          %159 = dma.done [#allocation5], 16
        $region32: #{tpu_custom_call.1} parent=27 // pred_fallthru
          _
        %s160 = sand.u32 %s49, 1
        %s161 = scalar_lea.sflag [#allocation3], %s160
        %s162 = sand.u32 %s49, 1
        %s163 = smul.addr %s162, 128
        %s164 = scalar_lea.vmem [#allocation6], %s163
        // Predicated region
        $region33: #{tpu_custom_call.1} parent=27 // pred_check
          %p165 = pneg %p62
        $region34: #{tpu_custom_call.1} parent=27 // pred_check_branch
          %167 = sbr.rel (%p165) target = $region36
        $region35: #{tpu_custom_call.1} parent=27 // pred_region
          %169 = dma.done %s161, 2048
        $region36: #{tpu_custom_call.1} parent=27 // pred_fallthru
          _
        %170 = sfence
        %p171 = pneg %p36
        %p172 = pneg %p33
        %s173 = sand.u32 %s49, 1
        %s174 = scalar_lea.sflag [#allocation3], %s173
        %s175 = sand.u32 %s49, 1
        %s176 = smul.addr %s175, 128
        %s177 = scalar_lea.vmem [#allocation6], %s176
        %p178 = pneg %p62
        %p179 = pneg %p59
        %p180 = pneg %p88
        %p181 = pneg %p85
        %s182 = sand.u32 %s75, 1
        %s183 = scalar_lea.sflag [#allocation4], %s182
        %s184 = sand.u32 %s75, 1
        %s185 = smul.addr %s184, 128
        %s186 = scalar_lea.vmem [#allocation7], %s185
        %s187 = smul.u32 2, %s20
        %s188 = ssub.s32 3, %s187
        %p189 = scmp.lt.s32.totalorder %s188, 2
        %s190 = scalar_select %p189, %s188, 2
        %s191 = smul.u32 8, %s190
        %s192 = smul.u32 %s191, 8
        %s193 = smul.u32 2, %s20
        %s194 = ssub.s32 3, %s193
        %p195 = scmp.lt.s32.totalorder %s194, 2
        %s196 = scalar_select %p195, %s194, 2
        %s197 = smul.u32 8, %s196
        %s198 = smul.u32 %s197, 8
        %s199 = sld [smem:[#allocation2]]
        %s200 = sld [smem:[#allocation2 + $0x1]]
        %v201 = vld [vmem:[%s164] sm:$0xff]
        %v202 = vld [vmem:[%s164 + $0x8] sm:$0xff]
        %v203 = vld [vmem:[%s164 + $0x10] sm:$0xff]
        %v204 = vld [vmem:[%s164 + $0x18] sm:$0xff]
        %v205 = vld [vmem:[%s164 + $0x20] sm:$0xff]
        %v206 = vld [vmem:[%s164 + $0x28] sm:$0xff]
        %v207 = vld [vmem:[%s164 + $0x30] sm:$0xff]
        %v208 = vld [vmem:[%s164 + $0x38] sm:$0xff]
        %v209 = vld [vmem:[%s164 + $0x40] sm:$0xff]
        %v210 = vld [vmem:[%s164 + $0x48] sm:$0xff]
        %v211 = vld [vmem:[%s164 + $0x50] sm:$0xff]
        %v212 = vld [vmem:[%s164 + $0x58] sm:$0xff]
        %v213 = vld [vmem:[%s164 + $0x60] sm:$0xff]
        %v214 = vld [vmem:[%s164 + $0x68] sm:$0xff]
        %v215 = vld [vmem:[%s164 + $0x70] sm:$0xff]
        %v216 = vld [vmem:[%s164 + $0x78] sm:$0xff]
        %v217 = vstv %s199
        %v218 = vmul.f32 %v201, %v217
        %v219 = vmul.f32 %v202, %v217
        %v220 = vmul.f32 %v203, %v217
        %v221 = vmul.f32 %v204, %v217
        %v222 = vmul.f32 %v205, %v217
        %v223 = vmul.f32 %v206, %v217
        %v224 = vmul.f32 %v207, %v217
        %v225 = vmul.f32 %v208, %v217
        %v226 = vmul.f32 %v209, %v217
        %v227 = vmul.f32 %v210, %v217
        %v228 = vmul.f32 %v211, %v217
        %v229 = vmul.f32 %v212, %v217
        %v230 = vmul.f32 %v213, %v217
        %v231 = vmul.f32 %v214, %v217
        %v232 = vmul.f32 %v215, %v217
        %v233 = vmul.f32 %v216, %v217
        %v234 = vstv %s200
        %v235 = vadd.f32 %v218, %v234
        %v236 = vadd.f32 %v219, %v234
        %v237 = vadd.f32 %v220, %v234
        %v238 = vadd.f32 %v221, %v234
        %v239 = vadd.f32 %v222, %v234
        %v240 = vadd.f32 %v223, %v234
        %v241 = vadd.f32 %v224, %v234
        %v242 = vadd.f32 %v225, %v234
        %v243 = vadd.f32 %v226, %v234
        %v244 = vadd.f32 %v227, %v234
        %v245 = vadd.f32 %v228, %v234
        %v246 = vadd.f32 %v229, %v234
        %v247 = vadd.f32 %v230, %v234
        %v248 = vadd.f32 %v231, %v234
        %v249 = vadd.f32 %v232, %v234
        %v250 = vadd.f32 %v233, %v234
        %251 = vst [vmem:[%s186] sm:$0xff] %v235
        %252 = vst [vmem:[%s186 + $0x8] sm:$0xff] %v236
        %253 = vst [vmem:[%s186 + $0x10] sm:$0xff] %v237
        %254 = vst [vmem:[%s186 + $0x18] sm:$0xff] %v238
        %255 = vst [vmem:[%s186 + $0x20] sm:$0xff] %v239
        %256 = vst [vmem:[%s186 + $0x28] sm:$0xff] %v240
        %257 = vst [vmem:[%s186 + $0x30] sm:$0xff] %v241
        %258 = vst [vmem:[%s186 + $0x38] sm:$0xff] %v242
        %259 = vst [vmem:[%s186 + $0x40] sm:$0xff] %v243
        %260 = vst [vmem:[%s186 + $0x48] sm:$0xff] %v244
        %261 = vst [vmem:[%s186 + $0x50] sm:$0xff] %v245
        %262 = vst [vmem:[%s186 + $0x58] sm:$0xff] %v246
        %263 = vst [vmem:[%s186 + $0x60] sm:$0xff] %v247
        %264 = vst [vmem:[%s186 + $0x68] sm:$0xff] %v248
        %265 = vst [vmem:[%s186 + $0x70] sm:$0xff] %v249
        %266 = vst [vmem:[%s186 + $0x78] sm:$0xff] %v250
        %s267 = sand.u32 %s75, 1
        %s268 = scalar_lea.sflag [#allocation4], %s267
        %s269 = sand.u32 %s75, 1
        %s270 = smul.addr %s269, 128
        %s271 = scalar_lea.vmem [#allocation7], %s270
        // Predicated region
        $region37: #{tpu_custom_call.1} parent=27 // pred_check
          %p272 = pneg %p85
        $region38: #{tpu_custom_call.1} parent=27 // pred_check_branch
          %274 = sbr.rel (%p272) target = $region40
        $region39: #{tpu_custom_call.1} parent=27 // pred_region
          %s275 = smul.u32 2, %s20
          %s276 = ssub.s32 3, %s275
          %p277 = scmp.lt.s32.totalorder %s276, 2
          %s278 = scalar_select %p277, %s276, 2
          %s279 = smul.u32 8, %s278
          %s280 = smul.u32 %s279, 8
          %s281 = ssub.s32 128, %s280
          %s282 = sshll.u32 %s281, 4
          %283 = vsyncadd %s268, %s282
          %p284 = scmp.ne.s32.totalorder 0, %s280
          %s285 = smul.addr %s275, 8
          %s286 = smul.addr %s285, 8
          %s287 = scalar_lea.hbm %s2, %s286
          %s288 = smul.u32 64, %s278
          %s289 = sshll.u32 %s271, 4
          %s290 = int_to_ptr.vmem [resolvable:$true] %s289
          %s291 = sshll.u32 %s287, 4
          %s292 = int_to_ptr.hbm [resolvable:$true] %s291
          %s293 = sshll.u32 %s288, 4
          %297 = dma.vmem_to_hbm [thread:$0]  (%p284), %s290, %s293, %s292, %s268, 1024, 1024, 64
        $region40: #{tpu_custom_call.1} parent=27 // pred_fallthru
          _
      $region28: #{tpu_custom_call.1} parent=5 // pred_fallthru
        _
      %p298 = scmp.le.s32.totalorder 2, %s15
      // Predicated region
      $region41: #{tpu_custom_call.1} parent=5 // pred_check
        %p299 = pneg %p298
      $region42: #{tpu_custom_call.1} parent=5 // pred_check_branch
        %301 = sbr.rel (%p299) target = $region44
      $region43: #{tpu_custom_call.1} parent=5 // pred_region
        %s302 = ssub.s32 %s15, 2
        // Predicated region
        $region45: #{tpu_custom_call.1} parent=43 // pred_check
          %p303 = pneg %p91
        $region46: #{tpu_custom_call.1} parent=43 // pred_check_branch
          %305 = sbr.rel (%p303) target = $region48
        $region47: #{tpu_custom_call.1} parent=43 // pred_region
          %s306 = sand.u32 %s76, 1
          %s307 = scalar_lea.sflag [#allocation4], %s306
          %s308 = sand.u32 %s76, 1
          %s309 = smul.addr %s308, 128
          %s310 = scalar_lea.vmem [#allocation7], %s309
          %312 = dma.done %s307, 2048
        $region48: #{tpu_custom_call.1} parent=43 // pred_fallthru
          _
      $region44: #{tpu_custom_call.1} parent=5 // pred_fallthru
        _
    $region6: #{tpu_custom_call.1} parent=1 // loop_footer
      %s19 = sadd.s32 1, %s15
    $region7: #{tpu_custom_call.1} parent=1 // loop_footer_branch
      %14 = sbr.rel target = $region3
    $region8: #{tpu_custom_call.1} parent=1 // loop_exit
      _
    %313 = vsyncpa [#allocation3], 1
    %s314 = scalar_lea.sflag [#allocation3], 1
    %315 = vsyncpa %s314, 1
    %316 = vsyncpa [#allocation4], 1
    %s317 = scalar_lea.sflag [#allocation4], 1
    %318 = vsyncpa %s317, 1
    %319 = vsyncpa [#allocation5], 1
    %s320 = scalar_lea.sflag [#allocation5], 1
    %321 = vsyncpa %s320, 1

</llo_original>
